<compile_context>
chip_gen: v7x
topology: tpu7x:2x2x1
jax: 0.10.0
libtpu: 0.0.40
codegen_flags: <defaults>
</compile_context>

<pallas_src>
import jax
import jax.numpy as jnp
from jax.experimental import pallas as pl
from jax.experimental.pallas import tpu as pltpu

D_IN = 405
D_IN_PAD = 512          # 405 padded up to a multiple of 128 (clean 4-vreg rows)
H1, H2, H3 = 256, 128, 128
D_OUT = 5
D_OUT_PAD = 128         # lane-dense output slab; wrapper slices [:, :5]


def _round_up(x, m):
    return (x + m - 1) // m * m


def qnet_kernel(x_ref,
                w1_ref, b1_ref,
                w2_ref, b2_ref,
                w3_ref, b3_ref,
                w4_ref, b4_ref,
                o_ref):
    # fc1 + relu (bf16 operands, f32 accumulate; bias/ReLU in f32)
    h = jnp.dot(x_ref[...], w1_ref[...], preferred_element_type=jnp.float32)
    h = jnp.maximum(h + b1_ref[...], 0.0)
    # fc2 + relu
    h = jnp.dot(h.astype(jnp.bfloat16), w2_ref[...],
                preferred_element_type=jnp.float32)
    h = jnp.maximum(h + b2_ref[...], 0.0)
    # fc3 + relu
    h = jnp.dot(h.astype(jnp.bfloat16), w3_ref[...],
                preferred_element_type=jnp.float32)
    h = jnp.maximum(h + b3_ref[...], 0.0)
    # fc4 (no activation); output is a (TB, 128) lane-dense slab
    h = jnp.dot(h.astype(jnp.bfloat16), w4_ref[...],
                preferred_element_type=jnp.float32)
    o_ref[...] = (h + b4_ref[...]).astype(o_ref.dtype)


def _prepare_params(params):
    """Pad + cast params for the kernel: bf16 weights, f32 biases.

    w1: (405,256) -> (512,256) zero-padded rows (matches zero-padded x cols).
    w4: (128,5)   -> (128,128) zero-padded cols; b4: (1,5) -> (1,128).
    """
    w1 = jnp.zeros((D_IN_PAD, H1), jnp.bfloat16).at[:D_IN, :].set(
        params["w1"].astype(jnp.bfloat16))
    w2 = params["w2"].astype(jnp.bfloat16)
    w3 = params["w3"].astype(jnp.bfloat16)
    w4 = jnp.zeros((H3, D_OUT_PAD), jnp.bfloat16).at[:, :D_OUT].set(
        params["w4"].astype(jnp.bfloat16))
    b1 = params["b1"].astype(jnp.float32)
    b2 = params["b2"].astype(jnp.float32)
    b3 = params["b3"].astype(jnp.float32)
    b4 = jnp.zeros((1, D_OUT_PAD), jnp.float32).at[:, :D_OUT].set(
        params["b4"].astype(jnp.float32))
    return w1, b1, w2, b2, w3, b3, w4, b4


def qnet_forward(x, params, tb=256):
    """x: (B, 405) float32. params: dict of weights (in,out) and biases (1,out)."""
    B = x.shape[0]
    # Batch tile: multiple of 8 sublanes, capped so per-step VMEM stays small
    # (sized for v7x's 64 MiB physical / 32 MiB scoped default).
    TB = min(tb, _round_up(max(B, 1), 8))
    B_pad = _round_up(B, TB)

    # Pad + cast the input once at the boundary: (B_pad, 512) bf16.
    x_p = jnp.zeros((B_pad, D_IN_PAD), jnp.bfloat16)
    x_p = x_p.at[:B, :D_IN].set(x.astype(jnp.bfloat16))

    w1, b1, w2, b2, w3, b3, w4, b4 = _prepare_params(params)

    def const_spec(shape):
        # Weights/biases: same block every grid step -> fetched once, stay resident.
        return pl.BlockSpec(shape, lambda i: (0,) * len(shape))

    grid = (pl.cdiv(B_pad, TB),)
    out_p = pl.pallas_call(
        qnet_kernel,
        out_shape=jax.ShapeDtypeStruct((B_pad, D_OUT_PAD), jnp.float32),
        grid=grid,
        in_specs=[
            pl.BlockSpec((TB, D_IN_PAD), lambda i: (i, 0)),   # x: streamed per tile
            const_spec((D_IN_PAD, H1)), const_spec((1, H1)),
            const_spec((H1, H2)),       const_spec((1, H2)),
            const_spec((H2, H3)),       const_spec((1, H3)),
            const_spec((H3, D_OUT_PAD)), const_spec((1, D_OUT_PAD)),
        ],
        out_specs=pl.BlockSpec((TB, D_OUT_PAD), lambda i: (i, 0)),
        compiler_params=pltpu.CompilerParams(
            dimension_semantics=("parallel",),
            vmem_limit_bytes=32 * 1024 * 1024,
        ),
    )(x_p, w1, b1, w2, b2, w3, b3, w4, b4)

    return out_p[:B, :D_OUT]


def init_params(key):
    """Deterministic init mimicking PyTorch nn.Linear default
    (U[-1/sqrt(fan_in), +1/sqrt(fan_in)])."""
    sizes = [(D_IN, H1), (H1, H2), (H2, H3), (H3, D_OUT)]
    params = {}
    for i, (fan_in, fan_out) in enumerate(sizes, start=1):
        key, kw, kb = jax.random.split(key, 3)
        bound = 1.0 / jnp.sqrt(jnp.float32(fan_in))
        params[f"w{i}"] = jax.random.uniform(
            kw, (fan_in, fan_out), dtype=jnp.float32, minval=-bound, maxval=bound)
        params[f"b{i}"] = jax.random.uniform(
            kb, (1, fan_out), dtype=jnp.float32, minval=-bound, maxval=bound)
    return params


def reference_forward_f32(x, params):
    h = jnp.maximum(x @ params["w1"] + params["b1"], 0.0)
    h = jnp.maximum(h @ params["w2"] + params["b2"], 0.0)
    h = jnp.maximum(h @ params["w3"] + params["b3"], 0.0)
    return h @ params["w4"] + params["b4"]


def reference_forward_bf16(x, params):
    """Same quantization scheme as the kernel: bf16 operands, f32 accumulate."""
    def mm(a, w):
        return jax.lax.dot(a.astype(jnp.bfloat16), w.astype(jnp.bfloat16),
                           preferred_element_type=jnp.float32)
    h = jnp.maximum(mm(x, params["w1"]) + params["b1"], 0.0)
    h = jnp.maximum(mm(h, params["w2"]) + params["b2"], 0.0)
    h = jnp.maximum(mm(h, params["w3"]) + params["b3"], 0.0)
    return mm(h, params["w4"]) + params["b4"]


# TODO(synk): sample_action / action / action_to_stearing / preprocess_lidar are
# host-side Python/NumPy policy helpers (random exploration, argmax-to-steering),
# not part of the forward pass — left out of the kernel.

if __name__ == "__main__":
    key = jax.random.PRNGKey(0)
    key, kx = jax.random.split(key)
    params = init_params(key)

    batch = 2
    x = jax.random.normal(kx, (batch, D_IN), dtype=jnp.float32)

    out = qnet_forward(x, params)
    out = jax.block_until_ready(out)
    assert out.shape == (batch, D_OUT), out.shape

    # Tight check against a reference using the same bf16-operand / f32-accumulate
    # quantization as the kernel.
    ref_bf16 = reference_forward_bf16(x, params)
    assert jnp.allclose(out, ref_bf16, atol=2e-3, rtol=2e-3), "mismatch vs bf16 reference"

    # Loose sanity check against the pure-f32 PyTorch-equivalent reference.
    ref_f32 = reference_forward_f32(x, params)
    assert jnp.allclose(out, ref_f32, atol=5e-2, rtol=5e-2), "mismatch vs f32 reference"

    print("KERNEL_OK")
</pallas_src>

<mosaic_0001>
module attributes {stable_mosaic.version = 11 : i64} {
  func.func @qnet_kernel(%arg0: i32, %arg1: memref<8x512xbf16, #tpu.memory_space<vmem>>, %arg2: memref<512x256xbf16, #tpu.memory_space<vmem>>, %arg3: memref<1x256xf32, #tpu.memory_space<vmem>>, %arg4: memref<256x128xbf16, #tpu.memory_space<vmem>>, %arg5: memref<1x128xf32, #tpu.memory_space<vmem>>, %arg6: memref<128x128xbf16, #tpu.memory_space<vmem>>, %arg7: memref<1x128xf32, #tpu.memory_space<vmem>>, %arg8: memref<128x128xbf16, #tpu.memory_space<vmem>>, %arg9: memref<1x128xf32, #tpu.memory_space<vmem>>, %arg10: memref<8x128xf32, #tpu.memory_space<vmem>>) attributes {dimension_semantics = [#tpu.dimension_semantics<parallel>], iteration_bounds = array<i64: 1>, scalar_prefetch = 0 : i64, scratch_operands = 0 : i64, tpu.core_type = #tpu.core_type<tc>, window_params = [{transform_indices = @transform_0, window_bounds = array<i64: 8, 512>}, {pipeline_mode = #tpu.pipeline_mode<synchronous>, transform_indices = @transform_1, window_bounds = array<i64: 512, 256>}, {pipeline_mode = #tpu.pipeline_mode<synchronous>, transform_indices = @transform_2, window_bounds = array<i64: 1, 256>}, {pipeline_mode = #tpu.pipeline_mode<synchronous>, transform_indices = @transform_3, window_bounds = array<i64: 256, 128>}, {pipeline_mode = #tpu.pipeline_mode<synchronous>, transform_indices = @transform_4, window_bounds = array<i64: 1, 128>}, {pipeline_mode = #tpu.pipeline_mode<synchronous>, transform_indices = @transform_5, window_bounds = array<i64: 128, 128>}, {pipeline_mode = #tpu.pipeline_mode<synchronous>, transform_indices = @transform_6, window_bounds = array<i64: 1, 128>}, {pipeline_mode = #tpu.pipeline_mode<synchronous>, transform_indices = @transform_7, window_bounds = array<i64: 128, 128>}, {pipeline_mode = #tpu.pipeline_mode<synchronous>, transform_indices = @transform_8, window_bounds = array<i64: 1, 128>}, {transform_indices = @transform_9, window_bounds = array<i64: 8, 128>}]} {
    %c0 = arith.constant 0 : index
    %c0_0 = arith.constant 0 : index
    %0 = vector.load %arg1[%c0, %c0_0] : memref<8x512xbf16, #tpu.memory_space<vmem>>, vector<8x512xbf16>
    %c0_1 = arith.constant 0 : index
    %c0_2 = arith.constant 0 : index
    %1 = vector.load %arg2[%c0_1, %c0_2] : memref<512x256xbf16, #tpu.memory_space<vmem>>, vector<512x256xbf16>
    %cst = arith.constant dense<0.000000e+00> : vector<8x256xf32>
    %2 = tpu.matmul %0, %1, %cst {dimension_numbers = #tpu.dot_dimension_numbers<[1], [0], [0], [1], [0, 0, 1, 1], [], []>} : vector<8x512xbf16>, vector<512x256xbf16>, vector<8x256xf32> -> vector<8x256xf32>
    %c0_3 = arith.constant 0 : index
    %c0_4 = arith.constant 0 : index
    %3 = vector.load %arg3[%c0_3, %c0_4] : memref<1x256xf32, #tpu.memory_space<vmem>>, vector<1x256xf32>
    %4 = vector.broadcast %3 : vector<1x256xf32> to vector<8x256xf32>
    %5 = arith.addf %2, %4 : vector<8x256xf32>
    %cst_5 = arith.constant 0.000000e+00 : f32
    %6 = vector.broadcast %cst_5 : f32 to vector<8x256xf32>
    %7 = arith.maximumf %5, %6 : vector<8x256xf32>
    %8 = arith.truncf %7 : vector<8x256xf32> to vector<8x256xbf16>
    %c0_6 = arith.constant 0 : index
    %c0_7 = arith.constant 0 : index
    %9 = vector.load %arg4[%c0_6, %c0_7] : memref<256x128xbf16, #tpu.memory_space<vmem>>, vector<256x128xbf16>
    %cst_8 = arith.constant dense<0.000000e+00> : vector<8x128xf32>
    %10 = tpu.matmul %8, %9, %cst_8 {dimension_numbers = #tpu.dot_dimension_numbers<[1], [0], [0], [1], [0, 0, 1, 1], [], []>} : vector<8x256xbf16>, vector<256x128xbf16>, vector<8x128xf32> -> vector<8x128xf32>
    %c0_9 = arith.constant 0 : index
    %c0_10 = arith.constant 0 : index
    %11 = vector.load %arg5[%c0_9, %c0_10] : memref<1x128xf32, #tpu.memory_space<vmem>>, vector<1x128xf32>
    %12 = vector.broadcast %11 : vector<1x128xf32> to vector<8x128xf32>
    %13 = arith.addf %10, %12 : vector<8x128xf32>
    %cst_11 = arith.constant 0.000000e+00 : f32
    %14 = vector.broadcast %cst_11 : f32 to vector<8x128xf32>
    %15 = arith.maximumf %13, %14 : vector<8x128xf32>
    %16 = arith.truncf %15 : vector<8x128xf32> to vector<8x128xbf16>
    %c0_12 = arith.constant 0 : index
    %c0_13 = arith.constant 0 : index
    %17 = vector.load %arg6[%c0_12, %c0_13] : memref<128x128xbf16, #tpu.memory_space<vmem>>, vector<128x128xbf16>
    %cst_14 = arith.constant dense<0.000000e+00> : vector<8x128xf32>
    %18 = tpu.matmul %16, %17, %cst_14 {dimension_numbers = #tpu.dot_dimension_numbers<[1], [0], [0], [1], [0, 0, 1, 1], [], []>} : vector<8x128xbf16>, vector<128x128xbf16>, vector<8x128xf32> -> vector<8x128xf32>
    %c0_15 = arith.constant 0 : index
    %c0_16 = arith.constant 0 : index
    %19 = vector.load %arg7[%c0_15, %c0_16] : memref<1x128xf32, #tpu.memory_space<vmem>>, vector<1x128xf32>
    %20 = vector.broadcast %19 : vector<1x128xf32> to vector<8x128xf32>
    %21 = arith.addf %18, %20 : vector<8x128xf32>
    %cst_17 = arith.constant 0.000000e+00 : f32
    %22 = vector.broadcast %cst_17 : f32 to vector<8x128xf32>
    %23 = arith.maximumf %21, %22 : vector<8x128xf32>
    %24 = arith.truncf %23 : vector<8x128xf32> to vector<8x128xbf16>
    %c0_18 = arith.constant 0 : index
    %c0_19 = arith.constant 0 : index
    %25 = vector.load %arg8[%c0_18, %c0_19] : memref<128x128xbf16, #tpu.memory_space<vmem>>, vector<128x128xbf16>
    %cst_20 = arith.constant dense<0.000000e+00> : vector<8x128xf32>
    %26 = tpu.matmul %24, %25, %cst_20 {dimension_numbers = #tpu.dot_dimension_numbers<[1], [0], [0], [1], [0, 0, 1, 1], [], []>} : vector<8x128xbf16>, vector<128x128xbf16>, vector<8x128xf32> -> vector<8x128xf32>
    %c0_21 = arith.constant 0 : index
    %c0_22 = arith.constant 0 : index
    %27 = vector.load %arg9[%c0_21, %c0_22] : memref<1x128xf32, #tpu.memory_space<vmem>>, vector<1x128xf32>
    %28 = vector.broadcast %27 : vector<1x128xf32> to vector<8x128xf32>
    %29 = arith.addf %26, %28 : vector<8x128xf32>
    %c0_23 = arith.constant 0 : index
    %c0_24 = arith.constant 0 : index
    %30 = vector.load %arg10[%c0_23, %c0_24] : memref<8x128xf32, #tpu.memory_space<vmem>>, vector<8x128xf32>
    tpu.vector_store %arg10[%c0_23, %c0_24], %29 {strides = array<i32>} : memref<8x128xf32, #tpu.memory_space<vmem>>, vector<8x128xf32>,
    return
  }
  func.func @transform_0(%arg0: i32) -> (i32, i32) {
    %c0_i32 = arith.constant 0 : i32
    %c0_i32_0 = arith.constant 0 : i32
    return %arg0, %c0_i32 : i32, i32
  }
  func.func @transform_1(%arg0: i32) -> (i32, i32) {
    %c0_i32 = arith.constant 0 : i32
    %c0_i32_0 = arith.constant 0 : i32
    %c0_i32_1 = arith.constant 0 : i32
    return %c0_i32, %c0_i32_0 : i32, i32
  }
  func.func @transform_2(%arg0: i32) -> (i32, i32) {
    %c0_i32 = arith.constant 0 : i32
    %c0_i32_0 = arith.constant 0 : i32
    %c0_i32_1 = arith.constant 0 : i32
    return %c0_i32, %c0_i32_0 : i32, i32
  }
  func.func @transform_3(%arg0: i32) -> (i32, i32) {
    %c0_i32 = arith.constant 0 : i32
    %c0_i32_0 = arith.constant 0 : i32
    %c0_i32_1 = arith.constant 0 : i32
    return %c0_i32, %c0_i32_0 : i32, i32
  }
  func.func @transform_4(%arg0: i32) -> (i32, i32) {
    %c0_i32 = arith.constant 0 : i32
    %c0_i32_0 = arith.constant 0 : i32
    %c0_i32_1 = arith.constant 0 : i32
    return %c0_i32, %c0_i32_0 : i32, i32
  }
  func.func @transform_5(%arg0: i32) -> (i32, i32) {
    %c0_i32 = arith.constant 0 : i32
    %c0_i32_0 = arith.constant 0 : i32
    %c0_i32_1 = arith.constant 0 : i32
    return %c0_i32, %c0_i32_0 : i32, i32
  }
  func.func @transform_6(%arg0: i32) -> (i32, i32) {
    %c0_i32 = arith.constant 0 : i32
    %c0_i32_0 = arith.constant 0 : i32
    %c0_i32_1 = arith.constant 0 : i32
    return %c0_i32, %c0_i32_0 : i32, i32
  }
  func.func @transform_7(%arg0: i32) -> (i32, i32) {
    %c0_i32 = arith.constant 0 : i32
    %c0_i32_0 = arith.constant 0 : i32
    %c0_i32_1 = arith.constant 0 : i32
    return %c0_i32, %c0_i32_0 : i32, i32
  }
  func.func @transform_8(%arg0: i32) -> (i32, i32) {
    %c0_i32 = arith.constant 0 : i32
    %c0_i32_0 = arith.constant 0 : i32
    %c0_i32_1 = arith.constant 0 : i32
    return %c0_i32, %c0_i32_0 : i32, i32
  }
  func.func @transform_9(%arg0: i32) -> (i32, i32) {
    %c0_i32 = arith.constant 0 : i32
    %c0_i32_0 = arith.constant 0 : i32
    return %arg0, %c0_i32 : i32, i32
  }
}

</mosaic_0001>

<llo_original>
// kernel: tpu_custom_call.1
$region0: #{tpu_custom_call.1}
  #allocation0 [shape = 'u32[]', space=smem, size = 0x4, offset = 0x4, fixed_abs, tag = 'smem constant byte address 0x4 - core index']
  #allocation1 [shape = 'u32[144,128]{1,0:T(1,128)}', space=vmem, size = 0x12000, scoped, tag = 'internal scratch']
  %s0 = inlined_call_operand.hbm [shape: bf16[8,512], index: 0, kind: input, shape index: {}]
  %s1 = inlined_call_operand.hbm [shape: bf16[512,256], index: 1, kind: input, shape index: {}]
  %s2 = inlined_call_operand.vmem [shape: f32[1,256], index: 2, kind: input, shape index: {}]
  %s3 = inlined_call_operand.hbm [shape: bf16[256,128], index: 3, kind: input, shape index: {}]
  %s4 = inlined_call_operand.vmem [shape: f32[1,128], index: 4, kind: input, shape index: {}]
  %s5 = inlined_call_operand.hbm [shape: bf16[128,128], index: 5, kind: input, shape index: {}]
  %s6 = inlined_call_operand.vmem [shape: f32[1,128], index: 6, kind: input, shape index: {}]
  %s7 = inlined_call_operand.hbm [shape: bf16[128,128], index: 7, kind: input, shape index: {}]
  %s8 = inlined_call_operand.vmem [shape: f32[1,128], index: 8, kind: input, shape index: {}]
  %s9 = inlined_call_operand.hbm [shape: f32[8,128], index: 9, kind: output, shape index: {}]
  %s10 = sld [smem:[#allocation0]]
  $region66: #{tpu_custom_call.1} parent=0
    _
  %s12 = ssub.s32 1, %s10
  %s13 = scalar_select 0, %s12, %s10
  $region1: #{tpu_custom_call.1} parent=0
    #allocation2 [shape = 'u8[8192]{0}', space=vmem, size = 0x2000, scoped, tag = 'input window, operand 0, single buffered']
    #allocation3 [shape = 's32[1]{0}', space=sflag, size = 0x4, scoped, tag = 'scoped memory for tpu_custom_call.1']
    #allocation4 [shape = 's32[1]{0}', space=sflag, size = 0x4, scoped, tag = 'scoped memory for tpu_custom_call.1']
    #allocation5 [shape = 'u8[262144]{0}', space=vmem, size = 0x40000, scoped, tag = 'input window, operand 1, single buffered']
    #allocation6 [shape = 's32[1]{0}', space=sflag, size = 0x4, scoped, tag = 'scoped memory for tpu_custom_call.1']
    #allocation7 [shape = 'u8[65536]{0}', space=vmem, size = 0x10000, scoped, tag = 'input window, operand 3, single buffered']
    #allocation8 [shape = 'u8[32768]{0}', space=vmem, size = 0x8000, scoped, tag = 'input window, operand 5, single buffered']
    #allocation9 [shape = 's32[1]{0}', space=sflag, size = 0x4, scoped, tag = 'scoped memory for tpu_custom_call.1']
    #allocation10 [shape = 'u8[32768]{0}', space=vmem, size = 0x8000, scoped, tag = 'input window, operand 7, single buffered']
    #allocation11 [shape = 'u8[4096]{0}', space=vmem, size = 0x1000, scoped, tag = 'output window, operand 0, single buffered']
    %14 = vsyncpa [#allocation3], 0
    %15 = vsyncpa [#allocation6], 0
    %16 = vsyncpa [#allocation9], 0
    %17 = vsyncpa [#allocation4], 0
    // Predicated region
    $region2: #{tpu_custom_call.1} parent=1 // pred_check
      _
    $region3: #{tpu_custom_call.1} parent=1 // pred_check_branch
      %19 = sbr.rel (0) target = $region5
    $region4: #{tpu_custom_call.1} parent=1 // pred_region
      %s21 = ssub.s32 256, 256
      %22 = vsyncadd [#allocation3], %s21
      %s24 = sshll.u32 [#allocation2], 4
      %s25 = int_to_ptr.vmem [resolvable:$true] %s24
      %27 = dma.hbm_to_vmem [thread:$0]  %s0, 256, %s25, [#allocation3]
    $region5: #{tpu_custom_call.1} parent=1 // pred_fallthru
      _
    // Predicated region
    $region6: #{tpu_custom_call.1} parent=1 // pred_check
      _
    $region7: #{tpu_custom_call.1} parent=1 // pred_check_branch
      %29 = sbr.rel (0) target = $region9
    $region8: #{tpu_custom_call.1} parent=1 // pred_region
      %s31 = ssub.s32 8192, 8192
      %32 = vsyncadd [#allocation6], %s31
      %s33 = sshll.u32 [#allocation5], 4
      %s34 = int_to_ptr.vmem [resolvable:$true] %s33
      %39 = dma.hbm_to_vmem [thread:$0]  %s1, 8192, %s34, [#allocation6], 128, 128, 8
    $region9: #{tpu_custom_call.1} parent=1 // pred_fallthru
      _
    // Predicated region
    $region10: #{tpu_custom_call.1} parent=1 // pred_check
      _
    $region11: #{tpu_custom_call.1} parent=1 // pred_check_branch
      %41 = sbr.rel (0) target = $region13
    $region12: #{tpu_custom_call.1} parent=1 // pred_region
      _
    $region13: #{tpu_custom_call.1} parent=1 // pred_fallthru
      _
    // Predicated region
    $region14: #{tpu_custom_call.1} parent=1 // pred_check
      _
    $region15: #{tpu_custom_call.1} parent=1 // pred_check_branch
      %43 = sbr.rel (0) target = $region17
    $region16: #{tpu_custom_call.1} parent=1 // pred_region
      %s45 = ssub.s32 2048, 2048
      %46 = vsyncadd [#allocation6], %s45
      %s47 = sshll.u32 [#allocation7], 4
      %s48 = int_to_ptr.vmem [resolvable:$true] %s47
      %53 = dma.hbm_to_vmem [thread:$0]  %s3, 2048, %s48, [#allocation6], 64, 64, 4
    $region17: #{tpu_custom_call.1} parent=1 // pred_fallthru
      _
    // Predicated region
    $region18: #{tpu_custom_call.1} parent=1 // pred_check
      _
    $region19: #{tpu_custom_call.1} parent=1 // pred_check_branch
      %55 = sbr.rel (0) target = $region21
    $region20: #{tpu_custom_call.1} parent=1 // pred_region
      _
    $region21: #{tpu_custom_call.1} parent=1 // pred_fallthru
      _
    // Predicated region
    $region22: #{tpu_custom_call.1} parent=1 // pred_check
      _
    $region23: #{tpu_custom_call.1} parent=1 // pred_check_branch
      %57 = sbr.rel (0) target = $region25
    $region24: #{tpu_custom_call.1} parent=1 // pred_region
      %s59 = ssub.s32 1024, 1024
      %60 = vsyncadd [#allocation9], %s59
      %s61 = sshll.u32 [#allocation8], 4
      %s62 = int_to_ptr.vmem [resolvable:$true] %s61
      %67 = dma.hbm_to_vmem [thread:$0]  %s5, 1024, %s62, [#allocation9], 64, 64, 4
    $region25: #{tpu_custom_call.1} parent=1 // pred_fallthru
      _
    // Predicated region
    $region26: #{tpu_custom_call.1} parent=1 // pred_check
      _
    $region27: #{tpu_custom_call.1} parent=1 // pred_check_branch
      %69 = sbr.rel (0) target = $region29
    $region28: #{tpu_custom_call.1} parent=1 // pred_region
      _
    $region29: #{tpu_custom_call.1} parent=1 // pred_fallthru
      _
    // Predicated region
    $region30: #{tpu_custom_call.1} parent=1 // pred_check
      _
    $region31: #{tpu_custom_call.1} parent=1 // pred_check_branch
      %71 = sbr.rel (0) target = $region33
    $region32: #{tpu_custom_call.1} parent=1 // pred_region
      %s73 = ssub.s32 1024, 1024
      %74 = vsyncadd [#allocation9], %s73
      %s75 = sshll.u32 [#allocation10], 4
      %s76 = int_to_ptr.vmem [resolvable:$true] %s75
      %81 = dma.hbm_to_vmem [thread:$0]  %s7, 1024, %s76, [#allocation9], 64, 64, 4
    $region33: #{tpu_custom_call.1} parent=1 // pred_fallthru
      _
    // Predicated region
    $region34: #{tpu_custom_call.1} parent=1 // pred_check
      _
    $region35: #{tpu_custom_call.1} parent=1 // pred_check_branch
      %83 = sbr.rel (0) target = $region37
    $region36: #{tpu_custom_call.1} parent=1 // pred_region
      _
    $region37: #{tpu_custom_call.1} parent=1 // pred_fallthru
      _
    // Predicated region
    $region38: #{tpu_custom_call.1} parent=1 // pred_check
      _
    $region39: #{tpu_custom_call.1} parent=1 // pred_check_branch
      %85 = sbr.rel (0) target = $region41
    $region40: #{tpu_custom_call.1} parent=1 // pred_region
      %86 = dma.done [#allocation3], 256
    $region41: #{tpu_custom_call.1} parent=1 // pred_fallthru
      _
    // Predicated region
    $region42: #{tpu_custom_call.1} parent=1 // pred_check
      _
    $region43: #{tpu_custom_call.1} parent=1 // pred_check_branch
      %88 = sbr.rel (0) target = $region45
    $region44: #{tpu_custom_call.1} parent=1 // pred_region
      %89 = dma.done [#allocation6], 8192
    $region45: #{tpu_custom_call.1} parent=1 // pred_fallthru
      _
    // Predicated region
    $region46: #{tpu_custom_call.1} parent=1 // pred_check
      _
    $region47: #{tpu_custom_call.1} parent=1 // pred_check_branch
      %91 = sbr.rel (0) target = $region49
    $region48: #{tpu_custom_call.1} parent=1 // pred_region
      %92 = dma.done [#allocation6], 2048
    $region49: #{tpu_custom_call.1} parent=1 // pred_fallthru
      _
    // Predicated region
    $region50: #{tpu_custom_call.1} parent=1 // pred_check
      _
    $region51: #{tpu_custom_call.1} parent=1 // pred_check_branch
      %94 = sbr.rel (0) target = $region53
    $region52: #{tpu_custom_call.1} parent=1 // pred_region
      %95 = dma.done [#allocation9], 1024
    $region53: #{tpu_custom_call.1} parent=1 // pred_fallthru
      _
    // Predicated region
    $region54: #{tpu_custom_call.1} parent=1 // pred_check
      _
    $region55: #{tpu_custom_call.1} parent=1 // pred_check_branch
      %97 = sbr.rel (0) target = $region57
    $region56: #{tpu_custom_call.1} parent=1 // pred_region
      %98 = dma.done [#allocation9], 1024
    $region57: #{tpu_custom_call.1} parent=1 // pred_fallthru
      _
    %v100 = vld [vmem:[#allocation2] sm:$0xff]
    %v101 = vld [vmem:[#allocation2 + $0x8] sm:$0xff]
    %v102 = vld [vmem:[#allocation5] sm:$0xff]
    %v103 = vld [vmem:[#allocation5 + $0x8] sm:$0xff]
    %v104 = vld [vmem:[#allocation5 + $0x10] sm:$0xff]
    %v105 = vld [vmem:[#allocation5 + $0x18] sm:$0xff]
    %v106 = vld [vmem:[#allocation5 + $0x20] sm:$0xff]
    %v107 = vld [vmem:[#allocation5 + $0x28] sm:$0xff]
    %v108 = vld [vmem:[#allocation5 + $0x30] sm:$0xff]
    %v109 = vld [vmem:[#allocation5 + $0x38] sm:$0xff]
    %v110 = vld [vmem:[#allocation5 + $0x40] sm:$0xff]
    %v111 = vld [vmem:[#allocation5 + $0x48] sm:$0xff]
    %v112 = vld [vmem:[#allocation5 + $0x50] sm:$0xff]
    %v113 = vld [vmem:[#allocation5 + $0x58] sm:$0xff]
    %v114 = vld [vmem:[#allocation5 + $0x60] sm:$0xff]
    %v115 = vld [vmem:[#allocation5 + $0x68] sm:$0xff]
    %v116 = vld [vmem:[#allocation5 + $0x70] sm:$0xff]
    %v117 = vld [vmem:[#allocation5 + $0x78] sm:$0xff]
    %v118 = vld [vmem:[#allocation5 + $0x80] sm:$0xff]
    %v119 = vld [vmem:[#allocation5 + $0x88] sm:$0xff]
    %v120 = vld [vmem:[#allocation5 + $0x90] sm:$0xff]
    %v121 = vld [vmem:[#allocation5 + $0x98] sm:$0xff]
    %v122 = vld [vmem:[#allocation5 + $0xa0] sm:$0xff]
    %v123 = vld [vmem:[#allocation5 + $0xa8] sm:$0xff]
    %v124 = vld [vmem:[#allocation5 + $0xb0] sm:$0xff]
    %v125 = vld [vmem:[#allocation5 + $0xb8] sm:$0xff]
    %v126 = vld [vmem:[#allocation5 + $0xc0] sm:$0xff]
    %v127 = vld [vmem:[#allocation5 + $0xc8] sm:$0xff]
    %v128 = vld [vmem:[#allocation5 + $0xd0] sm:$0xff]
    %v129 = vld [vmem:[#allocation5 + $0xd8] sm:$0xff]
    %v130 = vld [vmem:[#allocation5 + $0xe0] sm:$0xff]
    %v131 = vld [vmem:[#allocation5 + $0xe8] sm:$0xff]
    %v132 = vld [vmem:[#allocation5 + $0xf0] sm:$0xff]
    %v133 = vld [vmem:[#allocation5 + $0xf8] sm:$0xff]
    %v134 = vld [vmem:[#allocation5 + $0x100] sm:$0xff]
    %v135 = vld [vmem:[#allocation5 + $0x108] sm:$0xff]
    %v136 = vld [vmem:[#allocation5 + $0x110] sm:$0xff]
    %v137 = vld [vmem:[#allocation5 + $0x118] sm:$0xff]
    %v138 = vld [vmem:[#allocation5 + $0x120] sm:$0xff]
    %v139 = vld [vmem:[#allocation5 + $0x128] sm:$0xff]
    %v140 = vld [vmem:[#allocation5 + $0x130] sm:$0xff]
    %v141 = vld [vmem:[#allocation5 + $0x138] sm:$0xff]
    %v142 = vld [vmem:[#allocation5 + $0x140] sm:$0xff]
    %v143 = vld [vmem:[#allocation5 + $0x148] sm:$0xff]
    %v144 = vld [vmem:[#allocation5 + $0x150] sm:$0xff]
    %v145 = vld [vmem:[#allocation5 + $0x158] sm:$0xff]
    %v146 = vld [vmem:[#allocation5 + $0x160] sm:$0xff]
    %v147 = vld [vmem:[#allocation5 + $0x168] sm:$0xff]
    %v148 = vld [vmem:[#allocation5 + $0x170] sm:$0xff]
    %v149 = vld [vmem:[#allocation5 + $0x178] sm:$0xff]
    %v150 = vld [vmem:[#allocation5 + $0x180] sm:$0xff]
    %v151 = vld [vmem:[#allocation5 + $0x188] sm:$0xff]
    %v152 = vld [vmem:[#allocation5 + $0x190] sm:$0xff]
    %v153 = vld [vmem:[#allocation5 + $0x198] sm:$0xff]
    %v154 = vld [vmem:[#allocation5 + $0x1a0] sm:$0xff]
    %v155 = vld [vmem:[#allocation5 + $0x1a8] sm:$0xff]
    %v156 = vld [vmem:[#allocation5 + $0x1b0] sm:$0xff]
    %v157 = vld [vmem:[#allocation5 + $0x1b8] sm:$0xff]
    %v158 = vld [vmem:[#allocation5 + $0x1c0] sm:$0xff]
    %v159 = vld [vmem:[#allocation5 + $0x1c8] sm:$0xff]
    %v160 = vld [vmem:[#allocation5 + $0x1d0] sm:$0xff]
    %v161 = vld [vmem:[#allocation5 + $0x1d8] sm:$0xff]
    %v162 = vld [vmem:[#allocation5 + $0x1e0] sm:$0xff]
    %v163 = vld [vmem:[#allocation5 + $0x1e8] sm:$0xff]
    %v164 = vld [vmem:[#allocation5 + $0x1f0] sm:$0xff]
    %v165 = vld [vmem:[#allocation5 + $0x1f8] sm:$0xff]
    %v166 = vld [vmem:[%s2] sm:$0x3]
    %v168 = vlaneseq
    %v169 = vshrl.u32 %v168, 7
    %v170 = vsub.s32 0, %v169
    %v171 = vrot.slane %v166, %v170
    %v172 = vlaneseq
    %v173 = vshrl.u32 %v172, 7
    %v174 = vsub.s32 1, %v173
    %v175 = vrot.slane %v166, %v174
    %v180 = vunpack.c.l.b16 %v100
    %v181 = vunpack.c.h.b16 %v100
    %v182 = vunpack.c.l.b16 %v101
    %v183 = vunpack.c.h.b16 %v101
    %v184 = vpack.c.b16 %v180, %v180
    %v185 = vpack.c.b16 %v181, %v181
    %v186 = vpack.c.b16 %v182, %v182
    %v187 = vpack.c.b16 %v183, %v183
    %v256 = vunpack.c.l.b16 %v102
    %v257 = vunpack.c.h.b16 %v102
    %v258 = vunpack.c.l.b16 %v103
    %v259 = vunpack.c.h.b16 %v103
    %v260 = vunpack.c.l.b16 %v104
    %v261 = vunpack.c.h.b16 %v104
    %v262 = vunpack.c.l.b16 %v105
    %v263 = vunpack.c.h.b16 %v105
    %v264 = vunpack.c.l.b16 %v106
    %v265 = vunpack.c.h.b16 %v106
    %v266 = vunpack.c.l.b16 %v107
    %v267 = vunpack.c.h.b16 %v107
    %v268 = vunpack.c.l.b16 %v108
    %v269 = vunpack.c.h.b16 %v108
    %v270 = vunpack.c.l.b16 %v109
    %v271 = vunpack.c.h.b16 %v109
    %v272 = vunpack.c.l.b16 %v110
    %v273 = vunpack.c.h.b16 %v110
    %v274 = vunpack.c.l.b16 %v111
    %v275 = vunpack.c.h.b16 %v111
    %v276 = vunpack.c.l.b16 %v112
    %v277 = vunpack.c.h.b16 %v112
    %v278 = vunpack.c.l.b16 %v113
    %v279 = vunpack.c.h.b16 %v113
    %v280 = vunpack.c.l.b16 %v114
    %v281 = vunpack.c.h.b16 %v114
    %v282 = vunpack.c.l.b16 %v115
    %v283 = vunpack.c.h.b16 %v115
    %v284 = vunpack.c.l.b16 %v116
    %v285 = vunpack.c.h.b16 %v116
    %v286 = vunpack.c.l.b16 %v117
    %v287 = vunpack.c.h.b16 %v117
    %v288 = vunpack.c.l.b16 %v118
    %v289 = vunpack.c.h.b16 %v118
    %v290 = vunpack.c.l.b16 %v119
    %v291 = vunpack.c.h.b16 %v119
    %v292 = vunpack.c.l.b16 %v120
    %v293 = vunpack.c.h.b16 %v120
    %v294 = vunpack.c.l.b16 %v121
    %v295 = vunpack.c.h.b16 %v121
    %v296 = vunpack.c.l.b16 %v122
    %v297 = vunpack.c.h.b16 %v122
    %v298 = vunpack.c.l.b16 %v123
    %v299 = vunpack.c.h.b16 %v123
    %v300 = vunpack.c.l.b16 %v124
    %v301 = vunpack.c.h.b16 %v124
    %v302 = vunpack.c.l.b16 %v125
    %v303 = vunpack.c.h.b16 %v125
    %v304 = vunpack.c.l.b16 %v126
    %v305 = vunpack.c.h.b16 %v126
    %v306 = vunpack.c.l.b16 %v127
    %v307 = vunpack.c.h.b16 %v127
    %v308 = vunpack.c.l.b16 %v128
    %v309 = vunpack.c.h.b16 %v128
    %v310 = vunpack.c.l.b16 %v129
    %v311 = vunpack.c.h.b16 %v129
    %v312 = vunpack.c.l.b16 %v130
    %v313 = vunpack.c.h.b16 %v130
    %v314 = vunpack.c.l.b16 %v131
    %v315 = vunpack.c.h.b16 %v131
    %v316 = vunpack.c.l.b16 %v132
    %v317 = vunpack.c.h.b16 %v132
    %v318 = vunpack.c.l.b16 %v133
    %v319 = vunpack.c.h.b16 %v133
    %v320 = vunpack.c.l.b16 %v134
    %v321 = vunpack.c.h.b16 %v134
    %v322 = vunpack.c.l.b16 %v135
    %v323 = vunpack.c.h.b16 %v135
    %v324 = vunpack.c.l.b16 %v136
    %v325 = vunpack.c.h.b16 %v136
    %v326 = vunpack.c.l.b16 %v137
    %v327 = vunpack.c.h.b16 %v137
    %v328 = vunpack.c.l.b16 %v138
    %v329 = vunpack.c.h.b16 %v138
    %v330 = vunpack.c.l.b16 %v139
    %v331 = vunpack.c.h.b16 %v139
    %v332 = vunpack.c.l.b16 %v140
    %v333 = vunpack.c.h.b16 %v140
    %v334 = vunpack.c.l.b16 %v141
    %v335 = vunpack.c.h.b16 %v141
    %v336 = vunpack.c.l.b16 %v142
    %v337 = vunpack.c.h.b16 %v142
    %v338 = vunpack.c.l.b16 %v143
    %v339 = vunpack.c.h.b16 %v143
    %v340 = vunpack.c.l.b16 %v144
    %v341 = vunpack.c.h.b16 %v144
    %v342 = vunpack.c.l.b16 %v145
    %v343 = vunpack.c.h.b16 %v145
    %v344 = vunpack.c.l.b16 %v146
    %v345 = vunpack.c.h.b16 %v146
    %v346 = vunpack.c.l.b16 %v147
    %v347 = vunpack.c.h.b16 %v147
    %v348 = vunpack.c.l.b16 %v148
    %v349 = vunpack.c.h.b16 %v148
    %v350 = vunpack.c.l.b16 %v149
    %v351 = vunpack.c.h.b16 %v149
    %v352 = vunpack.c.l.b16 %v150
    %v353 = vunpack.c.h.b16 %v150
    %v354 = vunpack.c.l.b16 %v151
    %v355 = vunpack.c.h.b16 %v151
    %v356 = vunpack.c.l.b16 %v152
    %v357 = vunpack.c.h.b16 %v152
    %v358 = vunpack.c.l.b16 %v153
    %v359 = vunpack.c.h.b16 %v153
    %v360 = vunpack.c.l.b16 %v154
    %v361 = vunpack.c.h.b16 %v154
    %v362 = vunpack.c.l.b16 %v155
    %v363 = vunpack.c.h.b16 %v155
    %v364 = vunpack.c.l.b16 %v156
    %v365 = vunpack.c.h.b16 %v156
    %v366 = vunpack.c.l.b16 %v157
    %v367 = vunpack.c.h.b16 %v157
    %v368 = vunpack.c.l.b16 %v158
    %v369 = vunpack.c.h.b16 %v158
    %v370 = vunpack.c.l.b16 %v159
    %v371 = vunpack.c.h.b16 %v159
    %v372 = vunpack.c.l.b16 %v160
    %v373 = vunpack.c.h.b16 %v160
    %v374 = vunpack.c.l.b16 %v161
    %v375 = vunpack.c.h.b16 %v161
    %v376 = vunpack.c.l.b16 %v162
    %v377 = vunpack.c.h.b16 %v162
    %v378 = vunpack.c.l.b16 %v163
    %v379 = vunpack.c.h.b16 %v163
    %v380 = vunpack.c.l.b16 %v164
    %v381 = vunpack.c.h.b16 %v164
    %v382 = vunpack.c.l.b16 %v165
    %v383 = vunpack.c.h.b16 %v165
    %v384 = vpack.c.b16 %v258, %v256
    %v385 = vpack.c.b16 %v259, %v257
    %v386 = vpack.c.b16 %v262, %v260
    %v387 = vpack.c.b16 %v263, %v261
    %v388 = vpack.c.b16 %v266, %v264
    %v389 = vpack.c.b16 %v267, %v265
    %v390 = vpack.c.b16 %v270, %v268
    %v391 = vpack.c.b16 %v271, %v269
    %v392 = vpack.c.b16 %v274, %v272
    %v393 = vpack.c.b16 %v275, %v273
    %v394 = vpack.c.b16 %v278, %v276
    %v395 = vpack.c.b16 %v279, %v277
    %v396 = vpack.c.b16 %v282, %v280
    %v397 = vpack.c.b16 %v283, %v281
    %v398 = vpack.c.b16 %v286, %v284
    %v399 = vpack.c.b16 %v287, %v285
    %v400 = vpack.c.b16 %v290, %v288
    %v401 = vpack.c.b16 %v291, %v289
    %v402 = vpack.c.b16 %v294, %v292
    %v403 = vpack.c.b16 %v295, %v293
    %v404 = vpack.c.b16 %v298, %v296
    %v405 = vpack.c.b16 %v299, %v297
    %v406 = vpack.c.b16 %v302, %v300
    %v407 = vpack.c.b16 %v303, %v301
    %v408 = vpack.c.b16 %v306, %v304
    %v409 = vpack.c.b16 %v307, %v305
    %v410 = vpack.c.b16 %v310, %v308
    %v411 = vpack.c.b16 %v311, %v309
    %v412 = vpack.c.b16 %v314, %v312
    %v413 = vpack.c.b16 %v315, %v313
    %v414 = vpack.c.b16 %v318, %v316
    %v415 = vpack.c.b16 %v319, %v317
    %v416 = vpack.c.b16 %v322, %v320
    %v417 = vpack.c.b16 %v323, %v321
    %v418 = vpack.c.b16 %v326, %v324
    %v419 = vpack.c.b16 %v327, %v325
    %v420 = vpack.c.b16 %v330, %v328
    %v421 = vpack.c.b16 %v331, %v329
    %v422 = vpack.c.b16 %v334, %v332
    %v423 = vpack.c.b16 %v335, %v333
    %v424 = vpack.c.b16 %v338, %v336
    %v425 = vpack.c.b16 %v339, %v337
    %v426 = vpack.c.b16 %v342, %v340
    %v427 = vpack.c.b16 %v343, %v341
    %v428 = vpack.c.b16 %v346, %v344
    %v429 = vpack.c.b16 %v347, %v345
    %v430 = vpack.c.b16 %v350, %v348
    %v431 = vpack.c.b16 %v351, %v349
    %v432 = vpack.c.b16 %v354, %v352
    %v433 = vpack.c.b16 %v355, %v353
    %v434 = vpack.c.b16 %v358, %v356
    %v435 = vpack.c.b16 %v359, %v357
    %v436 = vpack.c.b16 %v362, %v360
    %v437 = vpack.c.b16 %v363, %v361
    %v438 = vpack.c.b16 %v366, %v364
    %v439 = vpack.c.b16 %v367, %v365
    %v440 = vpack.c.b16 %v370, %v368
    %v441 = vpack.c.b16 %v371, %v369
    %v442 = vpack.c.b16 %v374, %v372
    %v443 = vpack.c.b16 %v375, %v373
    %v444 = vpack.c.b16 %v378, %v376
    %v445 = vpack.c.b16 %v379, %v377
    %v446 = vpack.c.b16 %v382, %v380
    %v447 = vpack.c.b16 %v383, %v381
    %512 = vmatprep.subr.bf16.mxu0 %v385
    %513 = vmatpush1.bf16.msra.mxu0 %v384
    %514 = vmatprep.subr.bf16.mxu0 %v387
    %515 = vmatpush1.bf16.msra.mxu0 %v386
    %516 = vmatprep.subr.bf16.mxu0 %v389
    %517 = vmatpush1.bf16.msra.mxu0 %v388
    %518 = vmatprep.subr.bf16.mxu0 %v391
    %519 = vmatpush1.bf16.msra.mxu0 %v390
    %520 = vmatprep.subr.bf16.mxu0 %v393
    %521 = vmatpush1.bf16.msra.mxu0 %v392
    %522 = vmatprep.subr.bf16.mxu0 %v395
    %523 = vmatpush1.bf16.msra.mxu0 %v394
    %524 = vmatprep.subr.bf16.mxu0 %v397
    %525 = vmatpush1.bf16.msra.mxu0 %v396
    %526 = vmatprep.subr.bf16.mxu0 %v399
    %527 = vmatpush1.bf16.msra.mxu0 %v398
    %528 = vmatprep.subr.bf16.mxu0 %v401
    %529 = vmatpush1.bf16.msra.mxu0 %v400
    %530 = vmatprep.subr.bf16.mxu0 %v403
    %531 = vmatpush1.bf16.msra.mxu0 %v402
    %532 = vmatprep.subr.bf16.mxu0 %v405
    %533 = vmatpush1.bf16.msra.mxu0 %v404
    %534 = vmatprep.subr.bf16.mxu0 %v407
    %535 = vmatpush1.bf16.msra.mxu0 %v406
    %536 = vmatprep.subr.bf16.mxu0 %v409
    %537 = vmatpush1.bf16.msra.mxu0 %v408
    %538 = vmatprep.subr.bf16.mxu0 %v411
    %539 = vmatpush1.bf16.msra.mxu0 %v410
    %540 = vmatprep.subr.bf16.mxu0 %v413
    %541 = vmatpush1.bf16.msra.mxu0 %v412
    %542 = vmatprep.subr.bf16.mxu0 %v415
    %543 = vmatpush1.bf16.msra.mxu0 %v414
    %544 = vmatprep.mubr.bf16.mxu0 %v185
    %545 = vmatmul.mubr.bf16.gmra.mrb[0].mxu0 %v184
    %v546 = vpop.f32.mrb[0].mxu0
    %v547 = vadd.f32 %v171, %v546
    %v548 = vpop.f32.mrb[0].mxu0
    %v549 = vadd.f32 %v175, %v548
    %v550 = vpop.f32.mrb[0].mxu0
    %v551 = vpop.f32.mrb[0].mxu0
    %552 = vdwg.mxu0
    %553 = vmatprep.subr.bf16.mxu0 %v417
    %554 = vmatpush1.bf16.msra.mxu0 %v416
    %555 = vmatprep.subr.bf16.mxu0 %v419
    %556 = vmatpush1.bf16.msra.mxu0 %v418
    %557 = vmatprep.subr.bf16.mxu0 %v421
    %558 = vmatpush1.bf16.msra.mxu0 %v420
    %559 = vmatprep.subr.bf16.mxu0 %v423
    %560 = vmatpush1.bf16.msra.mxu0 %v422
    %561 = vmatprep.subr.bf16.mxu0 %v425
    %562 = vmatpush1.bf16.msra.mxu0 %v424
    %563 = vmatprep.subr.bf16.mxu0 %v427
    %564 = vmatpush1.bf16.msra.mxu0 %v426
    %565 = vmatprep.subr.bf16.mxu0 %v429
    %566 = vmatpush1.bf16.msra.mxu0 %v428
    %567 = vmatprep.subr.bf16.mxu0 %v431
    %568 = vmatpush1.bf16.msra.mxu0 %v430
    %569 = vmatprep.subr.bf16.mxu0 %v433
    %570 = vmatpush1.bf16.msra.mxu0 %v432
    %571 = vmatprep.subr.bf16.mxu0 %v435
    %572 = vmatpush1.bf16.msra.mxu0 %v434
    %573 = vmatprep.subr.bf16.mxu0 %v437
    %574 = vmatpush1.bf16.msra.mxu0 %v436
    %575 = vmatprep.subr.bf16.mxu0 %v439
    %576 = vmatpush1.bf16.msra.mxu0 %v438
    %577 = vmatprep.subr.bf16.mxu0 %v441
    %578 = vmatpush1.bf16.msra.mxu0 %v440
    %579 = vmatprep.subr.bf16.mxu0 %v443
    %580 = vmatpush1.bf16.msra.mxu0 %v442
    %581 = vmatprep.subr.bf16.mxu0 %v445
    %582 = vmatpush1.bf16.msra.mxu0 %v444
    %583 = vmatprep.subr.bf16.mxu0 %v447
    %584 = vmatpush1.bf16.msra.mxu0 %v446
    %585 = vmatprep.mubr.bf16.mxu0 %v187
    %586 = vmatmul.mubr.bf16.gmra.mrb[0].mxu0 %v186
    %v587 = vpop.f32.mrb[0].mxu0
    %v588 = vadd.f32 %v547, %v587
    %v589 = vpop.f32.mrb[0].mxu0
    %v590 = vadd.f32 %v549, %v589
    %v591 = vpop.f32.mrb[0].mxu0
    %v592 = vpop.f32.mrb[0].mxu0
    %593 = vdwg.mxu0
    %v594 = vmax.f32 %v588, 0.0
    %v595 = vmax.f32 %v590, 0.0
    %v596 = vpack.c.bf16 %v594, %v594
    %v597 = vpack.c.bf16 %v595, %v595
    %v598 = vld [vmem:[#allocation7] sm:$0xf]
    %v599 = vld [vmem:[#allocation7 + $0x4] sm:$0xf]
    %v600 = vld [vmem:[#allocation7 + $0x8] sm:$0xf]
    %v601 = vld [vmem:[#allocation7 + $0xc] sm:$0xf]
    %v602 = vld [vmem:[#allocation7 + $0x10] sm:$0xf]
    %v603 = vld [vmem:[#allocation7 + $0x14] sm:$0xf]
    %v604 = vld [vmem:[#allocation7 + $0x18] sm:$0xf]
    %v605 = vld [vmem:[#allocation7 + $0x1c] sm:$0xf]
    %v606 = vld [vmem:[#allocation7 + $0x20] sm:$0xf]
    %v607 = vld [vmem:[#allocation7 + $0x24] sm:$0xf]
    %v608 = vld [vmem:[#allocation7 + $0x28] sm:$0xf]
    %v609 = vld [vmem:[#allocation7 + $0x2c] sm:$0xf]
    %v610 = vld [vmem:[#allocation7 + $0x30] sm:$0xf]
    %v611 = vld [vmem:[#allocation7 + $0x34] sm:$0xf]
    %v612 = vld [vmem:[#allocation7 + $0x38] sm:$0xf]
    %v613 = vld [vmem:[#allocation7 + $0x3c] sm:$0xf]
    %v614 = vld [vmem:[#allocation7 + $0x40] sm:$0xf]
    %v615 = vld [vmem:[#allocation7 + $0x44] sm:$0xf]
    %v616 = vld [vmem:[#allocation7 + $0x48] sm:$0xf]
    %v617 = vld [vmem:[#allocation7 + $0x4c] sm:$0xf]
    %v618 = vld [vmem:[#allocation7 + $0x50] sm:$0xf]
    %v619 = vld [vmem:[#allocation7 + $0x54] sm:$0xf]
    %v620 = vld [vmem:[#allocation7 + $0x58] sm:$0xf]
    %v621 = vld [vmem:[#allocation7 + $0x5c] sm:$0xf]
    %v622 = vld [vmem:[#allocation7 + $0x60] sm:$0xf]
    %v623 = vld [vmem:[#allocation7 + $0x64] sm:$0xf]
    %v624 = vld [vmem:[#allocation7 + $0x68] sm:$0xf]
    %v625 = vld [vmem:[#allocation7 + $0x6c] sm:$0xf]
    %v626 = vld [vmem:[#allocation7 + $0x70] sm:$0xf]
    %v627 = vld [vmem:[#allocation7 + $0x74] sm:$0xf]
    %v628 = vld [vmem:[#allocation7 + $0x78] sm:$0xf]
    %v629 = vld [vmem:[#allocation7 + $0x7c] sm:$0xf]
    %v630 = vld [vmem:[%s4] sm:$0x1]
    %v632 = vlaneseq
    %v633 = vshrl.u32 %v632, 7
    %v634 = vsub.s32 0, %v633
    %v635 = vrot.slane %v630, %v634
    %v669 = vunpack.c.l.b16 %v598
    %v670 = vunpack.c.l.b16 %v599
    %v671 = vunpack.c.l.b16 %v600
    %v672 = vunpack.c.l.b16 %v601
    %v673 = vunpack.c.l.b16 %v602
    %v674 = vunpack.c.l.b16 %v603
    %v675 = vunpack.c.l.b16 %v604
    %v676 = vunpack.c.l.b16 %v605
    %v677 = vunpack.c.l.b16 %v606
    %v678 = vunpack.c.l.b16 %v607
    %v679 = vunpack.c.l.b16 %v608
    %v680 = vunpack.c.l.b16 %v609
    %v681 = vunpack.c.l.b16 %v610
    %v682 = vunpack.c.l.b16 %v611
    %v683 = vunpack.c.l.b16 %v612
    %v684 = vunpack.c.l.b16 %v613
    %v685 = vunpack.c.l.b16 %v614
    %v686 = vunpack.c.l.b16 %v615
    %v687 = vunpack.c.l.b16 %v616
    %v688 = vunpack.c.l.b16 %v617
    %v689 = vunpack.c.l.b16 %v618
    %v690 = vunpack.c.l.b16 %v619
    %v691 = vunpack.c.l.b16 %v620
    %v692 = vunpack.c.l.b16 %v621
    %v693 = vunpack.c.l.b16 %v622
    %v694 = vunpack.c.l.b16 %v623
    %v695 = vunpack.c.l.b16 %v624
    %v696 = vunpack.c.l.b16 %v625
    %v697 = vunpack.c.l.b16 %v626
    %v698 = vunpack.c.l.b16 %v627
    %v699 = vunpack.c.l.b16 %v628
    %v700 = vunpack.c.l.b16 %v629
    %v701 = vpack.c.b16 %v670, %v669
    %v702 = vpack.c.b16 %v672, %v671
    %v703 = vpack.c.b16 %v674, %v673
    %v704 = vpack.c.b16 %v676, %v675
    %v705 = vpack.c.b16 %v678, %v677
    %v706 = vpack.c.b16 %v680, %v679
    %v707 = vpack.c.b16 %v682, %v681
    %v708 = vpack.c.b16 %v684, %v683
    %v709 = vpack.c.b16 %v686, %v685
    %v710 = vpack.c.b16 %v688, %v687
    %v711 = vpack.c.b16 %v690, %v689
    %v712 = vpack.c.b16 %v692, %v691
    %v713 = vpack.c.b16 %v694, %v693
    %v714 = vpack.c.b16 %v696, %v695
    %v715 = vpack.c.b16 %v698, %v697
    %v716 = vpack.c.b16 %v700, %v699
    %733 = vmatprep.subr.bf16.mxu0 0
    %734 = vmatpush1.bf16.msra.mxu0 %v701
    %735 = vmatprep.subr.bf16.mxu0 0
    %736 = vmatpush1.bf16.msra.mxu0 %v702
    %737 = vmatprep.subr.bf16.mxu0 0
    %738 = vmatpush1.bf16.msra.mxu0 %v703
    %739 = vmatprep.subr.bf16.mxu0 0
    %740 = vmatpush1.bf16.msra.mxu0 %v704
    %741 = vmatprep.subr.bf16.mxu0 0
    %742 = vmatpush1.bf16.msra.mxu0 %v705
    %743 = vmatprep.subr.bf16.mxu0 0
    %744 = vmatpush1.bf16.msra.mxu0 %v706
    %745 = vmatprep.subr.bf16.mxu0 0
    %746 = vmatpush1.bf16.msra.mxu0 %v707
    %747 = vmatprep.subr.bf16.mxu0 0
    %748 = vmatpush1.bf16.msra.mxu0 %v708
    %749 = vmatprep.subr.bf16.mxu0 0
    %750 = vmatpush1.bf16.msra.mxu0 %v709
    %751 = vmatprep.subr.bf16.mxu0 0
    %752 = vmatpush1.bf16.msra.mxu0 %v710
    %753 = vmatprep.subr.bf16.mxu0 0
    %754 = vmatpush1.bf16.msra.mxu0 %v711
    %755 = vmatprep.subr.bf16.mxu0 0
    %756 = vmatpush1.bf16.msra.mxu0 %v712
    %757 = vmatprep.subr.bf16.mxu0 0
    %758 = vmatpush1.bf16.msra.mxu0 %v713
    %759 = vmatprep.subr.bf16.mxu0 0
    %760 = vmatpush1.bf16.msra.mxu0 %v714
    %761 = vmatprep.subr.bf16.mxu0 0
    %762 = vmatpush1.bf16.msra.mxu0 %v715
    %763 = vmatprep.subr.bf16.mxu0 0
    %764 = vmatpush1.bf16.msra.mxu0 %v716
    %765 = vmatprep.mubr.bf16.mxu0 %v597
    %766 = vmatmul.mubr.bf16.gmra.mrb[0].mxu0 %v596
    %v767 = vpop.f32.mrb[0].mxu0
    %v768 = vadd.f32 %v635, %v767
    %v769 = vpop.f32.mrb[0].mxu0
    %v770 = vpop.f32.mrb[0].mxu0
    %v771 = vpop.f32.mrb[0].mxu0
    %772 = vdwg.mxu0
    %v773 = vmax.f32 %v768, 0.0
    %v774 = vpack.c.bf16 %v773, %v773
    %v775 = vld [vmem:[#allocation8] sm:$0xf]
    %v776 = vld [vmem:[#allocation8 + $0x4] sm:$0xf]
    %v777 = vld [vmem:[#allocation8 + $0x8] sm:$0xf]
    %v778 = vld [vmem:[#allocation8 + $0xc] sm:$0xf]
    %v779 = vld [vmem:[#allocation8 + $0x10] sm:$0xf]
    %v780 = vld [vmem:[#allocation8 + $0x14] sm:$0xf]
    %v781 = vld [vmem:[#allocation8 + $0x18] sm:$0xf]
    %v782 = vld [vmem:[#allocation8 + $0x1c] sm:$0xf]
    %v783 = vld [vmem:[#allocation8 + $0x20] sm:$0xf]
    %v784 = vld [vmem:[#allocation8 + $0x24] sm:$0xf]
    %v785 = vld [vmem:[#allocation8 + $0x28] sm:$0xf]
    %v786 = vld [vmem:[#allocation8 + $0x2c] sm:$0xf]
    %v787 = vld [vmem:[#allocation8 + $0x30] sm:$0xf]
    %v788 = vld [vmem:[#allocation8 + $0x34] sm:$0xf]
    %v789 = vld [vmem:[#allocation8 + $0x38] sm:$0xf]
    %v790 = vld [vmem:[#allocation8 + $0x3c] sm:$0xf]
    %v791 = vld [vmem:[%s6] sm:$0x1]
    %v793 = vlaneseq
    %v794 = vshrl.u32 %v793, 7
    %v795 = vsub.s32 0, %v794
    %v796 = vrot.slane %v791, %v795
    %v814 = vunpack.c.l.b16 %v775
    %v815 = vunpack.c.l.b16 %v776
    %v816 = vunpack.c.l.b16 %v777
    %v817 = vunpack.c.l.b16 %v778
    %v818 = vunpack.c.l.b16 %v779
    %v819 = vunpack.c.l.b16 %v780
    %v820 = vunpack.c.l.b16 %v781
    %v821 = vunpack.c.l.b16 %v782
    %v822 = vunpack.c.l.b16 %v783
    %v823 = vunpack.c.l.b16 %v784
    %v824 = vunpack.c.l.b16 %v785
    %v825 = vunpack.c.l.b16 %v786
    %v826 = vunpack.c.l.b16 %v787
    %v827 = vunpack.c.l.b16 %v788
    %v828 = vunpack.c.l.b16 %v789
    %v829 = vunpack.c.l.b16 %v790
    %v830 = vpack.c.b16 %v815, %v814
    %v831 = vpack.c.b16 %v817, %v816
    %v832 = vpack.c.b16 %v819, %v818
    %v833 = vpack.c.b16 %v821, %v820
    %v834 = vpack.c.b16 %v823, %v822
    %v835 = vpack.c.b16 %v825, %v824
    %v836 = vpack.c.b16 %v827, %v826
    %v837 = vpack.c.b16 %v829, %v828
    %846 = vmatprep.subr.bf16.mxu0 0
    %847 = vmatpush1.bf16.msra.mxu0 %v830
    %848 = vmatprep.subr.bf16.mxu0 0
    %849 = vmatpush1.bf16.msra.mxu0 %v831
    %850 = vmatprep.subr.bf16.mxu0 0
    %851 = vmatpush1.bf16.msra.mxu0 %v832
    %852 = vmatprep.subr.bf16.mxu0 0
    %853 = vmatpush1.bf16.msra.mxu0 %v833
    %854 = vmatprep.subr.bf16.mxu0 0
    %855 = vmatpush1.bf16.msra.mxu0 %v834
    %856 = vmatprep.subr.bf16.mxu0 0
    %857 = vmatpush1.bf16.msra.mxu0 %v835
    %858 = vmatprep.subr.bf16.mxu0 0
    %859 = vmatpush1.bf16.msra.mxu0 %v836
    %860 = vmatprep.subr.bf16.mxu0 0
    %861 = vmatpush1.bf16.msra.mxu0 %v837
    %862 = vmatprep.subr.bf16.mxu0 0
    %863 = vmatpush1.bf16.msra.mxu0 0
    %864 = vmatprep.subr.bf16.mxu0 0
    %865 = vmatpush1.bf16.msra.mxu0 0
    %866 = vmatprep.subr.bf16.mxu0 0
    %867 = vmatpush1.bf16.msra.mxu0 0
    %868 = vmatprep.subr.bf16.mxu0 0
    %869 = vmatpush1.bf16.msra.mxu0 0
    %870 = vmatprep.subr.bf16.mxu0 0
    %871 = vmatpush1.bf16.msra.mxu0 0
    %872 = vmatprep.subr.bf16.mxu0 0
    %873 = vmatpush1.bf16.msra.mxu0 0
    %874 = vmatprep.subr.bf16.mxu0 0
    %875 = vmatpush1.bf16.msra.mxu0 0
    %876 = vmatprep.subr.bf16.mxu0 0
    %877 = vmatpush1.bf16.msra.mxu0 0
    %878 = vmatprep.mubr.bf16.mxu0 0
    %879 = vmatmul.mubr.bf16.gmra.mrb[0].mxu0 %v774
    %v880 = vpop.f32.mrb[0].mxu0
    %v881 = vadd.f32 %v796, %v880
    %v882 = vpop.f32.mrb[0].mxu0
    %v883 = vpop.f32.mrb[0].mxu0
    %v884 = vpop.f32.mrb[0].mxu0
    %885 = vdwg.mxu0
    %v886 = vmax.f32 %v881, 0.0
    %v887 = vpack.c.bf16 %v886, %v886
    %v888 = vld [vmem:[#allocation10] sm:$0xf]
    %v889 = vld [vmem:[#allocation10 + $0x4] sm:$0xf]
    %v890 = vld [vmem:[#allocation10 + $0x8] sm:$0xf]
    %v891 = vld [vmem:[#allocation10 + $0xc] sm:$0xf]
    %v892 = vld [vmem:[#allocation10 + $0x10] sm:$0xf]
    %v893 = vld [vmem:[#allocation10 + $0x14] sm:$0xf]
    %v894 = vld [vmem:[#allocation10 + $0x18] sm:$0xf]
    %v895 = vld [vmem:[#allocation10 + $0x1c] sm:$0xf]
    %v896 = vld [vmem:[#allocation10 + $0x20] sm:$0xf]
    %v897 = vld [vmem:[#allocation10 + $0x24] sm:$0xf]
    %v898 = vld [vmem:[#allocation10 + $0x28] sm:$0xf]
    %v899 = vld [vmem:[#allocation10 + $0x2c] sm:$0xf]
    %v900 = vld [vmem:[#allocation10 + $0x30] sm:$0xf]
    %v901 = vld [vmem:[#allocation10 + $0x34] sm:$0xf]
    %v902 = vld [vmem:[#allocation10 + $0x38] sm:$0xf]
    %v903 = vld [vmem:[#allocation10 + $0x3c] sm:$0xf]
    %v904 = vld [vmem:[%s8] sm:$0x1]
    %v906 = vlaneseq
    %v907 = vshrl.u32 %v906, 7
    %v908 = vsub.s32 0, %v907
    %v909 = vrot.slane %v904, %v908
    %v927 = vunpack.c.l.b16 %v888
    %v928 = vunpack.c.l.b16 %v889
    %v929 = vunpack.c.l.b16 %v890
    %v930 = vunpack.c.l.b16 %v891
    %v931 = vunpack.c.l.b16 %v892
    %v932 = vunpack.c.l.b16 %v893
    %v933 = vunpack.c.l.b16 %v894
    %v934 = vunpack.c.l.b16 %v895
    %v935 = vunpack.c.l.b16 %v896
    %v936 = vunpack.c.l.b16 %v897
    %v937 = vunpack.c.l.b16 %v898
    %v938 = vunpack.c.l.b16 %v899
    %v939 = vunpack.c.l.b16 %v900
    %v940 = vunpack.c.l.b16 %v901
    %v941 = vunpack.c.l.b16 %v902
    %v942 = vunpack.c.l.b16 %v903
    %v943 = vpack.c.b16 %v928, %v927
    %v944 = vpack.c.b16 %v930, %v929
    %v945 = vpack.c.b16 %v932, %v931
    %v946 = vpack.c.b16 %v934, %v933
    %v947 = vpack.c.b16 %v936, %v935
    %v948 = vpack.c.b16 %v938, %v937
    %v949 = vpack.c.b16 %v940, %v939
    %v950 = vpack.c.b16 %v942, %v941
    %959 = vmatprep.subr.bf16.mxu0 0
    %960 = vmatpush1.bf16.msra.mxu0 %v943
    %961 = vmatprep.subr.bf16.mxu0 0
    %962 = vmatpush1.bf16.msra.mxu0 %v944
    %963 = vmatprep.subr.bf16.mxu0 0
    %964 = vmatpush1.bf16.msra.mxu0 %v945
    %965 = vmatprep.subr.bf16.mxu0 0
    %966 = vmatpush1.bf16.msra.mxu0 %v946
    %967 = vmatprep.subr.bf16.mxu0 0
    %968 = vmatpush1.bf16.msra.mxu0 %v947
    %969 = vmatprep.subr.bf16.mxu0 0
    %970 = vmatpush1.bf16.msra.mxu0 %v948
    %971 = vmatprep.subr.bf16.mxu0 0
    %972 = vmatpush1.bf16.msra.mxu0 %v949
    %973 = vmatprep.subr.bf16.mxu0 0
    %974 = vmatpush1.bf16.msra.mxu0 %v950
    %975 = vmatprep.subr.bf16.mxu0 0
    %976 = vmatpush1.bf16.msra.mxu0 0
    %977 = vmatprep.subr.bf16.mxu0 0
    %978 = vmatpush1.bf16.msra.mxu0 0
    %979 = vmatprep.subr.bf16.mxu0 0
    %980 = vmatpush1.bf16.msra.mxu0 0
    %981 = vmatprep.subr.bf16.mxu0 0
    %982 = vmatpush1.bf16.msra.mxu0 0
    %983 = vmatprep.subr.bf16.mxu0 0
    %984 = vmatpush1.bf16.msra.mxu0 0
    %985 = vmatprep.subr.bf16.mxu0 0
    %986 = vmatpush1.bf16.msra.mxu0 0
    %987 = vmatprep.subr.bf16.mxu0 0
    %988 = vmatpush1.bf16.msra.mxu0 0
    %989 = vmatprep.subr.bf16.mxu0 0
    %990 = vmatpush1.bf16.msra.mxu0 0
    %991 = vmatprep.mubr.bf16.mxu0 0
    %992 = vmatmul.mubr.bf16.gmra.mrb[0].mxu0 %v887
    %v993 = vpop.f32.mrb[0].mxu0
    %v994 = vadd.f32 %v909, %v993
    %v995 = vpop.f32.mrb[0].mxu0
    %v996 = vpop.f32.mrb[0].mxu0
    %v997 = vpop.f32.mrb[0].mxu0
    %998 = vdwg.mxu0
    %999 = vst [vmem:[#allocation11] sm:$0xff] %v994
    // Predicated region
    $region58: #{tpu_custom_call.1} parent=1 // pred_check
      _
    $region59: #{tpu_custom_call.1} parent=1 // pred_check_branch
      %1001 = sbr.rel (0) target = $region61
    $region60: #{tpu_custom_call.1} parent=1 // pred_region
      %s1003 = ssub.s32 128, 128
      %1004 = vsyncadd [#allocation4], %s1003
      %s1006 = sshll.u32 [#allocation11], 4
      %s1007 = int_to_ptr.vmem [resolvable:$true] %s1006
      %1009 = dma.vmem_to_hbm [thread:$0]  %s1007, 128, %s9, [#allocation4]
    $region61: #{tpu_custom_call.1} parent=1 // pred_fallthru
      _
    // Predicated region
    $region62: #{tpu_custom_call.1} parent=1 // pred_check
      _
    $region63: #{tpu_custom_call.1} parent=1 // pred_check_branch
      %1011 = sbr.rel (0) target = $region65
    $region64: #{tpu_custom_call.1} parent=1 // pred_region
      %1012 = dma.done [#allocation4], 128
    $region65: #{tpu_custom_call.1} parent=1 // pred_fallthru
      _
    %1013 = vsyncpa [#allocation3], 1
    %1014 = vsyncpa [#allocation6], 1
    %1015 = vsyncpa [#allocation9], 1
    %1016 = vsyncpa [#allocation4], 1

</llo_original>
